<compile_context>
chip_gen: v7x
topology: tpu7x:2x2x1
jax: 0.10.0
libtpu: 0.0.40
codegen_flags: <defaults>
</compile_context>

<pallas_src>
import jax
import jax.numpy as jnp
from jax import lax
from jax.experimental import pallas as pl
from jax.experimental.pallas import tpu as pltpu

_LANE = 128


def _round_up(x, m):
    return (x + m - 1) // m * m


def _mlp_kernel(x_ref, w1_ref, b1_ref, w2_ref, b2_ref, w3_ref, b3_ref, o_ref):
    """Fused 3-layer MLP over one batch tile, batch-on-lanes orientation.

    x_ref : (bt, F)    streamed per grid step (native dtype)
    w*/b* : PyTorch-layout params (out, in) / (out, 1), VMEM-resident
    o_ref : (1, 1, bt) lane-dense output block
    """
    x = x_ref[...].astype(jnp.float32)                              # (bt, F)

    # fc1 + ReLU: contract F on the last dim of both operands -> (16, bt),
    # keeping the batch on lanes (transposed-rhs dot, q@k^T-style).
    h1 = lax.dot_general(w1_ref[...], x, (((1,), (1,)), ((), ())),
                         preferred_element_type=jnp.float32)        # (16, bt)
    h1 = jnp.maximum(h1 + b1_ref[...], 0.0)

    # fc2 + ReLU: standard (8,16) @ (16,bt) matmul.
    h2 = jnp.dot(w2_ref[...], h1, preferred_element_type=jnp.float32)
    h2 = jnp.maximum(h2 + b2_ref[...], 0.0)                         # (8, bt)

    # fc3 + sigmoid: (1,8) @ (8,bt) -> (1,bt); already lane-dense, store as-is.
    z = jnp.dot(w3_ref[...], h2, preferred_element_type=jnp.float32) + b3_ref[...]
    o_ref[0] = jax.nn.sigmoid(z).astype(o_ref.dtype)                # (1, bt)


def net_forward(x, params, *, batch_tile=8192):
    """sigmoid(relu(relu(x W1^T + b1) W2^T + b2) W3^T + b3).

    x: (B, n_features) float array. Returns (B, 1) float32.
    batch_tile is a tunable; sweep ~4096-16384 for large batches.
    """
    w1, b1, w2, b2, w3, b3 = params   # (16,F),(16,1),(8,16),(8,1),(1,8),(1,1)
    B, F = x.shape

    # ---- batch-tile selection --------------------------------------------
    # Big tiles amortize per-grid-step overhead; the 32768 cap keeps the
    # lane-padded f32 activations comfortably inside v7x's 64 MiB VMEM.
    bt_req = min(max(_round_up(batch_tile, _LANE), _LANE), 32768)
    if B <= bt_req:
        # Split small/medium batches into (up to) two lane-aligned tiles so the
        # "parallel" batch axis can use both TensorCores on v7x.
        bt = min(bt_req, max(_round_up(pl.cdiv(B, 2), _LANE), _LANE))
    else:
        bt = bt_req
    num_tiles = pl.cdiv(B, bt)        # ragged last tile: no padded copy of x

    w1f, w2f, w3f = (jnp.asarray(w, jnp.float32) for w in (w1, w2, w3))
    b1f, b2f, b3f = (jnp.asarray(b, jnp.float32) for b in (b1, b2, b3))

    # ---- VMEM budget (actual requirement + headroom) ----------------------
    f32b = 4
    x_stream = 2 * bt * F * f32b                      # double-buffered x tiles
    out_stream = 2 * bt * f32b                        # double-buffered out tiles
    acts = bt * (F + 16 + 8 + 8 + 8) * f32b           # in-kernel f32 values (padded)
    weights = 2 * f32b * sum(int(a.size) for a in (w1f, b1f, w2f, b2f, w3f, b3f))
    vmem_limit = int(min(max(x_stream + out_stream + acts + weights + (4 << 20),
                             16 << 20), 48 << 20))

    resident = lambda shape: pl.BlockSpec(shape, lambda i: (0, 0))

    out3d = pl.pallas_call(
        _mlp_kernel,
        # Lane-dense output layout: (num_tiles, 1, bt); block = (1, 1, bt).
        out_shape=jax.ShapeDtypeStruct((num_tiles, 1, bt), jnp.float32),
        grid_spec=pltpu.PrefetchScalarGridSpec(
            num_scalar_prefetch=0,
            grid=(num_tiles,),
            in_specs=[
                pl.BlockSpec((bt, F), lambda i: (i, 0)),    # streaming x tile
                resident(w1f.shape), resident(b1f.shape),   # VMEM-resident params
                resident(w2f.shape), resident(b2f.shape),
                resident(w3f.shape), resident(b3f.shape),
            ],
            out_specs=pl.BlockSpec((1, 1, bt), lambda i: (i, 0, 0)),
        ),
        compiler_params=pltpu.CompilerParams(
            dimension_semantics=("parallel",),   # batch tiles shard across TCs (v7x)
            vmem_limit_bytes=vmem_limit,
        ),
    )(x, w1f, b1f, w2f, b2f, w3f, b3f)

    # (num_tiles, 1, bt) flattens in batch order; drop the ragged-tile tail.
    return out3d.reshape(num_tiles * bt, 1)[:B]


def init_params(key, n_features):
    """PyTorch-layout params: W (out, in), b (out, 1); U(-1/sqrt(fan_in), +) init."""
    def linear(key, fan_in, fan_out):
        kw, kb = jax.random.split(key)
        bound = 1.0 / (fan_in ** 0.5)
        w = jax.random.uniform(kw, (fan_out, fan_in), jnp.float32, -bound, bound)
        b = jax.random.uniform(kb, (fan_out, 1), jnp.float32, -bound, bound)
        return w, b

    k1, k2, k3 = jax.random.split(key, 3)
    w1, b1 = linear(k1, n_features, 16)
    w2, b2 = linear(k2, 16, 8)
    w3, b3 = linear(k3, 8, 1)
    return (w1, b1, w2, b2, w3, b3)


def net_forward_ref(x, params):
    """Plain-JAX f32 reference for correctness checking."""
    w1, b1, w2, b2, w3, b3 = params
    hi = jax.lax.Precision.HIGHEST
    h1 = jnp.maximum(jnp.dot(x, w1.T, precision=hi) + b1.T, 0.0)
    h2 = jnp.maximum(jnp.dot(h1, w2.T, precision=hi) + b2.T, 0.0)
    return jax.nn.sigmoid(jnp.dot(h2, w3.T, precision=hi) + b3.T)


if __name__ == "__main__":
    key = jax.random.PRNGKey(0)
    kx, kp = jax.random.split(key)

    n_features = 32
    batch = 20          # not lane/tile aligned -> exercises the ragged-tile path

    x = jax.random.normal(kx, (batch, n_features), jnp.float32)
    params = init_params(kp, n_features)

    out = jax.block_until_ready(net_forward(x, params))
    ref = net_forward_ref(x, params)

    assert out.shape == (batch, 1)
    assert bool(jnp.all(jnp.isfinite(out)))
    # All-f32 pipeline; tolerance covers MXU accumulation-order differences.
    assert jnp.allclose(out, ref, atol=2e-3, rtol=2e-3), "mismatch vs reference"

    print("KERNEL_OK")
</pallas_src>

<mosaic_0001>
module attributes {stable_mosaic.version = 11 : i64} {
  func.func @_mlp_kernel(%arg0: i32, %arg1: memref<128x32xf32, #tpu.memory_space<vmem>>, %arg2: memref<16x32xf32, #tpu.memory_space<vmem>>, %arg3: memref<16x1xf32, #tpu.memory_space<vmem>>, %arg4: memref<8x16xf32, #tpu.memory_space<vmem>>, %arg5: memref<8x1xf32, #tpu.memory_space<vmem>>, %arg6: memref<1x8xf32, #tpu.memory_space<vmem>>, %arg7: memref<1x1xf32, #tpu.memory_space<vmem>>, %arg8: memref<1x1x128xf32, #tpu.memory_space<vmem>>) attributes {dimension_semantics = [#tpu.dimension_semantics<parallel>], iteration_bounds = array<i64: 1>, scalar_prefetch = 0 : i64, scratch_operands = 0 : i64, tpu.core_type = #tpu.core_type<tc>, window_params = [{transform_indices = @transform_0, window_bounds = array<i64: 128, 32>}, {pipeline_mode = #tpu.pipeline_mode<synchronous>, transform_indices = @transform_1, window_bounds = array<i64: 16, 32>}, {pipeline_mode = #tpu.pipeline_mode<synchronous>, transform_indices = @transform_2, window_bounds = array<i64: 16, 1>}, {pipeline_mode = #tpu.pipeline_mode<synchronous>, transform_indices = @transform_3, window_bounds = array<i64: 8, 16>}, {pipeline_mode = #tpu.pipeline_mode<synchronous>, transform_indices = @transform_4, window_bounds = array<i64: 8, 1>}, {pipeline_mode = #tpu.pipeline_mode<synchronous>, transform_indices = @transform_5, window_bounds = array<i64: 1, 8>}, {pipeline_mode = #tpu.pipeline_mode<synchronous>, transform_indices = @transform_6, window_bounds = array<i64: 1, 1>}, {transform_indices = @transform_7, window_bounds = array<i64: 1, 1, 128>}]} {
    %c0 = arith.constant 0 : index
    %c0_0 = arith.constant 0 : index
    %0 = vector.load %arg1[%c0, %c0_0] : memref<128x32xf32, #tpu.memory_space<vmem>>, vector<128x32xf32>
    %c0_1 = arith.constant 0 : index
    %c0_2 = arith.constant 0 : index
    %1 = vector.load %arg2[%c0_1, %c0_2] : memref<16x32xf32, #tpu.memory_space<vmem>>, vector<16x32xf32>
    %cst = arith.constant dense<0.000000e+00> : vector<16x128xf32>
    %2 = tpu.matmul %1, %0, %cst {dimension_numbers = #tpu.dot_dimension_numbers<[1], [1], [0], [0], [0, 0, 1, 0], [], []>} : vector<16x32xf32>, vector<128x32xf32>, vector<16x128xf32> -> vector<16x128xf32>
    %c0_3 = arith.constant 0 : index
    %c0_4 = arith.constant 0 : index
    %3 = vector.load %arg3[%c0_3, %c0_4] : memref<16x1xf32, #tpu.memory_space<vmem>>, vector<16x1xf32>
    %4 = vector.broadcast %3 : vector<16x1xf32> to vector<16x128xf32>
    %5 = arith.addf %2, %4 : vector<16x128xf32>
    %cst_5 = arith.constant 0.000000e+00 : f32
    %6 = vector.broadcast %cst_5 : f32 to vector<16x128xf32>
    %7 = arith.maximumf %5, %6 : vector<16x128xf32>
    %c0_6 = arith.constant 0 : index
    %c0_7 = arith.constant 0 : index
    %8 = vector.load %arg4[%c0_6, %c0_7] : memref<8x16xf32, #tpu.memory_space<vmem>>, vector<8x16xf32>
    %cst_8 = arith.constant dense<0.000000e+00> : vector<8x128xf32>
    %9 = tpu.matmul %8, %7, %cst_8 {dimension_numbers = #tpu.dot_dimension_numbers<[1], [0], [0], [1], [0, 0, 1, 1], [], []>} : vector<8x16xf32>, vector<16x128xf32>, vector<8x128xf32> -> vector<8x128xf32>
    %c0_9 = arith.constant 0 : index
    %c0_10 = arith.constant 0 : index
    %10 = vector.load %arg5[%c0_9, %c0_10] : memref<8x1xf32, #tpu.memory_space<vmem>>, vector<8x1xf32>
    %11 = vector.broadcast %10 : vector<8x1xf32> to vector<8x128xf32>
    %12 = arith.addf %9, %11 : vector<8x128xf32>
    %cst_11 = arith.constant 0.000000e+00 : f32
    %13 = vector.broadcast %cst_11 : f32 to vector<8x128xf32>
    %14 = arith.maximumf %12, %13 : vector<8x128xf32>
    %c0_12 = arith.constant 0 : index
    %c0_13 = arith.constant 0 : index
    %15 = vector.load %arg6[%c0_12, %c0_13] : memref<1x8xf32, #tpu.memory_space<vmem>>, vector<1x8xf32>
    %cst_14 = arith.constant dense<0.000000e+00> : vector<1x128xf32>
    %16 = tpu.matmul %15, %14, %cst_14 {dimension_numbers = #tpu.dot_dimension_numbers<[1], [0], [0], [1], [0, 0, 1, 1], [], []>} : vector<1x8xf32>, vector<8x128xf32>, vector<1x128xf32> -> vector<1x128xf32>
    %c0_15 = arith.constant 0 : index
    %c0_16 = arith.constant 0 : index
    %17 = vector.load %arg7[%c0_15, %c0_16] : memref<1x1xf32, #tpu.memory_space<vmem>>, vector<1x1xf32>
    %18 = vector.broadcast %17 : vector<1x1xf32> to vector<1x128xf32>
    %19 = arith.addf %16, %18 : vector<1x128xf32>
    %20 = arith.negf %19 : vector<1x128xf32>
    %21 = math.exp %20 : vector<1x128xf32>
    %cst_17 = arith.constant 1.000000e+00 : f32
    %22 = vector.broadcast %cst_17 : f32 to vector<1x128xf32>
    %23 = arith.addf %22, %21 : vector<1x128xf32>
    %24 = arith.divf %22, %23 : vector<1x128xf32>
    %c0_18 = arith.constant 0 : index
    %c0_19 = arith.constant 0 : index
    %c0_20 = arith.constant 0 : index
    %25 = vector.load %arg8[%c0_18, %c0_19, %c0_20] : memref<1x1x128xf32, #tpu.memory_space<vmem>>, vector<1x1x128xf32>
    %26 = vector.shape_cast %25 : vector<1x1x128xf32> to vector<1x128xf32>
    %27 = vector.shape_cast %24 : vector<1x128xf32> to vector<1x1x128xf32>
    tpu.vector_store %arg8[%c0_18, %c0_19, %c0_20], %27 {strides = array<i32>} : memref<1x1x128xf32, #tpu.memory_space<vmem>>, vector<1x1x128xf32>,
    return
  }
  func.func @transform_0(%arg0: i32) -> (i32, i32) {
    %c0_i32 = arith.constant 0 : i32
    %c0_i32_0 = arith.constant 0 : i32
    return %arg0, %c0_i32 : i32, i32
  }
  func.func @transform_1(%arg0: i32) -> (i32, i32) {
    %c0_i32 = arith.constant 0 : i32
    %c0_i32_0 = arith.constant 0 : i32
    %c0_i32_1 = arith.constant 0 : i32
    return %c0_i32, %c0_i32_0 : i32, i32
  }
  func.func @transform_2(%arg0: i32) -> (i32, i32) {
    %c0_i32 = arith.constant 0 : i32
    %c0_i32_0 = arith.constant 0 : i32
    %c0_i32_1 = arith.constant 0 : i32
    return %c0_i32, %c0_i32_0 : i32, i32
  }
  func.func @transform_3(%arg0: i32) -> (i32, i32) {
    %c0_i32 = arith.constant 0 : i32
    %c0_i32_0 = arith.constant 0 : i32
    %c0_i32_1 = arith.constant 0 : i32
    return %c0_i32, %c0_i32_0 : i32, i32
  }
  func.func @transform_4(%arg0: i32) -> (i32, i32) {
    %c0_i32 = arith.constant 0 : i32
    %c0_i32_0 = arith.constant 0 : i32
    %c0_i32_1 = arith.constant 0 : i32
    return %c0_i32, %c0_i32_0 : i32, i32
  }
  func.func @transform_5(%arg0: i32) -> (i32, i32) {
    %c0_i32 = arith.constant 0 : i32
    %c0_i32_0 = arith.constant 0 : i32
    %c0_i32_1 = arith.constant 0 : i32
    return %c0_i32, %c0_i32_0 : i32, i32
  }
  func.func @transform_6(%arg0: i32) -> (i32, i32) {
    %c0_i32 = arith.constant 0 : i32
    %c0_i32_0 = arith.constant 0 : i32
    %c0_i32_1 = arith.constant 0 : i32
    return %c0_i32, %c0_i32_0 : i32, i32
  }
  func.func @transform_7(%arg0: i32) -> (i32, i32, i32) {
    %c0_i32 = arith.constant 0 : i32
    %c0_i32_0 = arith.constant 0 : i32
    %c0_i32_1 = arith.constant 0 : i32
    return %arg0, %c0_i32, %c0_i32_0 : i32, i32, i32
  }
}

</mosaic_0001>

<llo_original>
// kernel: tpu_custom_call.1
$region0: #{tpu_custom_call.1}
  #allocation0 [shape = 'u32[]', space=smem, size = 0x4, offset = 0x4, fixed_abs, tag = 'smem constant byte address 0x4 - core index']
  #allocation1 [shape = 'u32[144,128]{1,0:T(1,128)}', space=vmem, size = 0x12000, scoped, tag = 'internal scratch']
  #allocation2 [shape = 'f32[1,1]{1,0:T(1,128)S(1)}', space=vmem, size = 0x200, scoped, tag = 'scoped memory for tpu_custom_call.1']
  %s0 = inlined_call_operand.vmem [shape: f32[20,32], index: 0, kind: input, shape index: {}]
  %s1 = inlined_call_operand.hbm [shape: f32[16,32], index: 1, kind: input, shape index: {}]
  %s2 = inlined_call_operand.vmem [shape: f32[16,1], index: 2, kind: input, shape index: {}]
  %s3 = inlined_call_operand.vmem [shape: f32[8,16], index: 3, kind: input, shape index: {}]
  %s4 = inlined_call_operand.vmem [shape: f32[8,1], index: 4, kind: input, shape index: {}]
  %s5 = inlined_call_operand.vmem [shape: f32[1,8], index: 5, kind: input, shape index: {}]
  %s6 = inlined_call_operand.<no memory space> [shape: f32[1,1], index: 6, kind: input, shape index: {}]
  %s7 = inlined_call_operand.hbm [shape: f32[1,1,128], index: 7, kind: output, shape index: {}]
  %s8 = sld [smem:[#allocation0]]
  $region42: #{tpu_custom_call.1} parent=0
    _
  %s10 = ssub.s32 1, %s8
  %s11 = scalar_select 0, %s10, %s8
  %v12 = vstv %s6
  %13 = vst [vmem:[#allocation2] sm:$0x1] %v12
  $region1: #{tpu_custom_call.1} parent=0
    #allocation3 [shape = 'u8[8192]{0}', space=vmem, size = 0x2000, scoped, tag = 'input window, operand 1, single buffered']
    #allocation4 [shape = 's32[1]{0}', space=sflag, size = 0x4, scoped, tag = 'scoped memory for tpu_custom_call.1']
    #allocation5 [shape = 's32[1]{0}', space=sflag, size = 0x4, scoped, tag = 'scoped memory for tpu_custom_call.1']
    #allocation6 [shape = 'u8[512]{0}', space=vmem, size = 0x400, scoped, tag = 'output window, operand 0, single buffered']
    %14 = vsyncpa [#allocation4], 0
    %15 = vsyncpa [#allocation5], 0
    // Predicated region
    $region2: #{tpu_custom_call.1} parent=1 // pred_check
      _
    $region3: #{tpu_custom_call.1} parent=1 // pred_check_branch
      %17 = sbr.rel (0) target = $region5
    $region4: #{tpu_custom_call.1} parent=1 // pred_region
      _
    $region5: #{tpu_custom_call.1} parent=1 // pred_fallthru
      _
    // Predicated region
    $region6: #{tpu_custom_call.1} parent=1 // pred_check
      _
    $region7: #{tpu_custom_call.1} parent=1 // pred_check_branch
      %19 = sbr.rel (0) target = $region9
    $region8: #{tpu_custom_call.1} parent=1 // pred_region
      %s21 = ssub.s32 256, 256
      %22 = vsyncadd [#allocation4], %s21
      %s23 = sshll.u32 [#allocation3], 4
      %s24 = int_to_ptr.vmem [resolvable:$true] %s23
      %29 = dma.hbm_to_vmem [thread:$0]  %s1, 256, %s24, [#allocation4], 128, 128, 8
    $region9: #{tpu_custom_call.1} parent=1 // pred_fallthru
      _
    // Predicated region
    $region10: #{tpu_custom_call.1} parent=1 // pred_check
      _
    $region11: #{tpu_custom_call.1} parent=1 // pred_check_branch
      %31 = sbr.rel (0) target = $region13
    $region12: #{tpu_custom_call.1} parent=1 // pred_region
      _
    $region13: #{tpu_custom_call.1} parent=1 // pred_fallthru
      _
    // Predicated region
    $region14: #{tpu_custom_call.1} parent=1 // pred_check
      _
    $region15: #{tpu_custom_call.1} parent=1 // pred_check_branch
      %33 = sbr.rel (0) target = $region17
    $region16: #{tpu_custom_call.1} parent=1 // pred_region
      _
    $region17: #{tpu_custom_call.1} parent=1 // pred_fallthru
      _
    // Predicated region
    $region18: #{tpu_custom_call.1} parent=1 // pred_check
      _
    $region19: #{tpu_custom_call.1} parent=1 // pred_check_branch
      %35 = sbr.rel (0) target = $region21
    $region20: #{tpu_custom_call.1} parent=1 // pred_region
      _
    $region21: #{tpu_custom_call.1} parent=1 // pred_fallthru
      _
    // Predicated region
    $region22: #{tpu_custom_call.1} parent=1 // pred_check
      _
    $region23: #{tpu_custom_call.1} parent=1 // pred_check_branch
      %37 = sbr.rel (0) target = $region25
    $region24: #{tpu_custom_call.1} parent=1 // pred_region
      _
    $region25: #{tpu_custom_call.1} parent=1 // pred_fallthru
      _
    // Predicated region
    $region26: #{tpu_custom_call.1} parent=1 // pred_check
      _
    $region27: #{tpu_custom_call.1} parent=1 // pred_check_branch
      %39 = sbr.rel (0) target = $region29
    $region28: #{tpu_custom_call.1} parent=1 // pred_region
      _
    $region29: #{tpu_custom_call.1} parent=1 // pred_fallthru
      _
    // Predicated region
    $region30: #{tpu_custom_call.1} parent=1 // pred_check
      _
    $region31: #{tpu_custom_call.1} parent=1 // pred_check_branch
      %41 = sbr.rel (0) target = $region33
    $region32: #{tpu_custom_call.1} parent=1 // pred_region
      %42 = dma.done [#allocation4], 256
    $region33: #{tpu_custom_call.1} parent=1 // pred_fallthru
      _
    %v43 = vld [vmem:[%s0] sm:$0xff]
    %v44 = vld [vmem:[%s0 + $0x8] sm:$0xff]
    %v45 = vld [vmem:[%s0 + $0x10] sm:$0xff]
    %v46 = vld [vmem:[%s0 + $0x18] sm:$0xff]
    %v47 = vld [vmem:[%s0 + $0x20] sm:$0xff]
    %v48 = vld [vmem:[%s0 + $0x28] sm:$0xff]
    %v49 = vld [vmem:[%s0 + $0x30] sm:$0xff]
    %v50 = vld [vmem:[%s0 + $0x38] sm:$0xff]
    %v51 = vld [vmem:[%s0 + $0x40] sm:$0xff]
    %v52 = vld [vmem:[%s0 + $0x48] sm:$0xff]
    %v53 = vld [vmem:[%s0 + $0x50] sm:$0xff]
    %v54 = vld [vmem:[%s0 + $0x58] sm:$0xff]
    %v55 = vld [vmem:[%s0 + $0x60] sm:$0xff]
    %v56 = vld [vmem:[%s0 + $0x68] sm:$0xff]
    %v57 = vld [vmem:[%s0 + $0x70] sm:$0xff]
    %v58 = vld [vmem:[%s0 + $0x78] sm:$0xff]
    %v59 = vld [vmem:[#allocation3] sm:$0xff]
    %v60 = vld [vmem:[#allocation3 + $0x8] sm:$0xff]
    %v61 = vld [vmem:[%s2] sm:$0xff]
    %v62 = vld [vmem:[%s2 + $0x8] sm:$0xff]
    %64 = vset.pattern.permute.xlu0 0
    %65 = vperm.xlu0 %64, %v61
    %v66 = vpop.permute.xlu0 %65
    %69 = vset.pattern.permute.xlu0 0
    %70 = vperm.xlu0 %69, %v62
    %v71 = vpop.permute.xlu0 %70
    %vm73 = vcmask 261120
    %v75 = vsel %vm73, %v59, 0
    %v78 = vsel %vm73, %v60, 0
    %v81 = vsel %vm73, %v43, 0
    %v84 = vsel %vm73, %v44, 0
    %v87 = vsel %vm73, %v45, 0
    %v90 = vsel %vm73, %v46, 0
    %v93 = vsel %vm73, %v47, 0
    %v96 = vsel %vm73, %v48, 0
    %v99 = vsel %vm73, %v49, 0
    %v102 = vsel %vm73, %v50, 0
    %v105 = vsel %vm73, %v51, 0
    %v108 = vsel %vm73, %v52, 0
    %v111 = vsel %vm73, %v53, 0
    %v114 = vsel %vm73, %v54, 0
    %v117 = vsel %vm73, %v55, 0
    %v120 = vsel %vm73, %v56, 0
    %v123 = vsel %vm73, %v57, 0
    %v126 = vsel %vm73, %v58, 0
    %128 = vmatprep.subr.mxu0 0.0
    %129 = vmatpush1.xpose.msra.mxu0 %v81
    %130 = vmatprep.subr.mxu0 0.0
    %131 = vmatpush1.xpose.msra.mxu0 %v84
    %132 = vmatprep.subr.mxu0 0.0
    %133 = vmatpush1.xpose.msra.mxu0 %v87
    %134 = vmatprep.subr.mxu0 0.0
    %135 = vmatpush1.xpose.msra.mxu0 %v90
    %136 = vmatprep.subr.mxu0 0.0
    %137 = vmatpush1.xpose.msra.mxu0 %v93
    %138 = vmatprep.subr.mxu0 0.0
    %139 = vmatpush1.xpose.msra.mxu0 %v96
    %140 = vmatprep.subr.mxu0 0.0
    %141 = vmatpush1.xpose.msra.mxu0 %v99
    %142 = vmatprep.subr.mxu0 0.0
    %143 = vmatpush1.xpose.msra.mxu0 %v102
    %144 = vmatprep.subr.mxu0 0.0
    %145 = vmatpush1.xpose.msra.mxu0 %v105
    %146 = vmatprep.subr.mxu0 0.0
    %147 = vmatpush1.xpose.msra.mxu0 %v108
    %148 = vmatprep.subr.mxu0 0.0
    %149 = vmatpush1.xpose.msra.mxu0 %v111
    %150 = vmatprep.subr.mxu0 0.0
    %151 = vmatpush1.xpose.msra.mxu0 %v114
    %152 = vmatprep.subr.mxu0 0.0
    %153 = vmatpush1.xpose.msra.mxu0 %v117
    %154 = vmatprep.subr.mxu0 0.0
    %155 = vmatpush1.xpose.msra.mxu0 %v120
    %156 = vmatprep.subr.mxu0 0.0
    %157 = vmatpush1.xpose.msra.mxu0 %v123
    %158 = vmatprep.subr.mxu0 0.0
    %159 = vmatpush1.xpose.msra.mxu0 %v126
    %160 = vmatprep.subr.mxu0 0.0
    %161 = vmatpush1.xpose.msra.mxu0 0.0
    %162 = vmatprep.subr.mxu0 0.0
    %163 = vmatpush1.xpose.msra.mxu0 0.0
    %164 = vmatprep.subr.mxu0 0.0
    %165 = vmatpush1.xpose.msra.mxu0 0.0
    %166 = vmatprep.subr.mxu0 0.0
    %167 = vmatpush1.xpose.msra.mxu0 0.0
    %168 = vmatprep.subr.mxu0 0.0
    %169 = vmatpush1.xpose.msra.mxu0 0.0
    %170 = vmatprep.subr.mxu0 0.0
    %171 = vmatpush1.xpose.msra.mxu0 0.0
    %172 = vmatprep.subr.mxu0 0.0
    %173 = vmatpush1.xpose.msra.mxu0 0.0
    %174 = vmatprep.subr.mxu0 0.0
    %175 = vmatpush1.xpose.msra.mxu0 0.0
    %176 = vmatprep.subr.mxu0 0.0
    %177 = vmatpush1.xpose.msra.mxu0 0.0
    %178 = vmatprep.subr.mxu0 0.0
    %179 = vmatpush1.xpose.msra.mxu0 0.0
    %180 = vmatprep.subr.mxu0 0.0
    %181 = vmatpush1.xpose.msra.mxu0 0.0
    %182 = vmatprep.subr.mxu0 0.0
    %183 = vmatpush1.xpose.msra.mxu0 0.0
    %184 = vmatprep.subr.mxu0 0.0
    %185 = vmatpush1.xpose.msra.mxu0 0.0
    %186 = vmatprep.subr.mxu0 0.0
    %187 = vmatpush1.xpose.msra.mxu0 0.0
    %188 = vmatprep.subr.mxu0 0.0
    %189 = vmatpush1.xpose.msra.mxu0 0.0
    %190 = vmatprep.subr.mxu0 0.0
    %191 = vmatpush1.xpose.msra.mxu0 0.0
    %192 = vmatprep.mubr.f32.mxu0 0.0
    %193 = vmatmul.mubr.f32.gmra.mrb[0].mxu0 %v75
    %v194 = vpop.f32.mrb[0].mxu0
    %v195 = vadd.f32 %v66, %v194
    %v196 = vpop.f32.mrb[0].mxu0
    %197 = vmatprep.mubr.f32.mxu0 0.0
    %198 = vmatmul.mubr.f32.gmra.mrb[0].mxu0 %v78
    %v199 = vpop.f32.mrb[0].mxu0
    %v200 = vadd.f32 %v71, %v199
    %v201 = vpop.f32.mrb[0].mxu0
    %202 = vdwg.mxu0
    %v203 = vmax.f32 %v195, 0.0
    %v204 = vmax.f32 %v200, 0.0
    %v205 = vld [vmem:[%s3] sm:$0xff]
    %v206 = vld [vmem:[%s4] sm:$0xff]
    %208 = vset.pattern.permute.xlu0 0
    %209 = vperm.xlu0 %208, %v206
    %v210 = vpop.permute.xlu0 %209
    %vm212 = vcmask 130048
    %v214 = vsel %vm212, %v205, 0
    %216 = vmatprep.subr.mxu0 0.0
    %217 = vmatpush1.msra.mxu0 %v203
    %218 = vmatprep.subr.mxu0 0.0
    %219 = vmatpush1.msra.mxu0 %v204
    %220 = vmatprep.subr.mxu0 0.0
    %221 = vmatpush1.msra.mxu0 0.0
    %222 = vmatprep.subr.mxu0 0.0
    %223 = vmatpush1.msra.mxu0 0.0
    %224 = vmatprep.subr.mxu0 0.0
    %225 = vmatpush1.msra.mxu0 0.0
    %226 = vmatprep.subr.mxu0 0.0
    %227 = vmatpush1.msra.mxu0 0.0
    %228 = vmatprep.subr.mxu0 0.0
    %229 = vmatpush1.msra.mxu0 0.0
    %230 = vmatprep.subr.mxu0 0.0
    %231 = vmatpush1.msra.mxu0 0.0
    %232 = vmatprep.subr.mxu0 0.0
    %233 = vmatpush1.msra.mxu0 0.0
    %234 = vmatprep.subr.mxu0 0.0
    %235 = vmatpush1.msra.mxu0 0.0
    %236 = vmatprep.subr.mxu0 0.0
    %237 = vmatpush1.msra.mxu0 0.0
    %238 = vmatprep.subr.mxu0 0.0
    %239 = vmatpush1.msra.mxu0 0.0
    %240 = vmatprep.subr.mxu0 0.0
    %241 = vmatpush1.msra.mxu0 0.0
    %242 = vmatprep.subr.mxu0 0.0
    %243 = vmatpush1.msra.mxu0 0.0
    %244 = vmatprep.subr.mxu0 0.0
    %245 = vmatpush1.msra.mxu0 0.0
    %246 = vmatprep.subr.mxu0 0.0
    %247 = vmatpush1.msra.mxu0 0.0
    %248 = vmatprep.subr.mxu0 0.0
    %249 = vmatpush1.msra.mxu0 0.0
    %250 = vmatprep.subr.mxu0 0.0
    %251 = vmatpush1.msra.mxu0 0.0
    %252 = vmatprep.subr.mxu0 0.0
    %253 = vmatpush1.msra.mxu0 0.0
    %254 = vmatprep.subr.mxu0 0.0
    %255 = vmatpush1.msra.mxu0 0.0
    %256 = vmatprep.subr.mxu0 0.0
    %257 = vmatpush1.msra.mxu0 0.0
    %258 = vmatprep.subr.mxu0 0.0
    %259 = vmatpush1.msra.mxu0 0.0
    %260 = vmatprep.subr.mxu0 0.0
    %261 = vmatpush1.msra.mxu0 0.0
    %262 = vmatprep.subr.mxu0 0.0
    %263 = vmatpush1.msra.mxu0 0.0
    %264 = vmatprep.subr.mxu0 0.0
    %265 = vmatpush1.msra.mxu0 0.0
    %266 = vmatprep.subr.mxu0 0.0
    %267 = vmatpush1.msra.mxu0 0.0
    %268 = vmatprep.subr.mxu0 0.0
    %269 = vmatpush1.msra.mxu0 0.0
    %270 = vmatprep.subr.mxu0 0.0
    %271 = vmatpush1.msra.mxu0 0.0
    %272 = vmatprep.subr.mxu0 0.0
    %273 = vmatpush1.msra.mxu0 0.0
    %274 = vmatprep.subr.mxu0 0.0
    %275 = vmatpush1.msra.mxu0 0.0
    %276 = vmatprep.subr.mxu0 0.0
    %277 = vmatpush1.msra.mxu0 0.0
    %278 = vmatprep.subr.mxu0 0.0
    %279 = vmatpush1.msra.mxu0 0.0
    %280 = vmatprep.mubr.f32.mxu0 0.0
    %281 = vmatmul.mubr.f32.gmra.mrb[0].mxu0 %v214
    %v282 = vpop.f32.mrb[0].mxu0
    %v283 = vadd.f32 %v210, %v282
    %v284 = vpop.f32.mrb[0].mxu0
    %285 = vdwg.mxu0
    %v286 = vmax.f32 %v283, 0.0
    %v287 = vld [vmem:[%s5] sm:$0x1]
    %v288 = vld [vmem:[#allocation2] sm:$0x1]
    %290 = vset.pattern.permute.xlu0 0
    %291 = vperm.xlu0 %290, %v288
    %v292 = vpop.permute.xlu0 %291
    %v294 = vlaneseq
    %v295 = vshrl.u32 %v294, 7
    %v296 = vsub.s32 0, %v295
    %v297 = vrot.slane %v292, %v296
    %vm298 = vcmask 64512
    %v300 = vsel %vm298, %v287, 0
    %302 = vmatprep.subr.mxu0 0.0
    %303 = vmatpush1.msra.mxu0 %v286
    %304 = vmatprep.subr.mxu0 0.0
    %305 = vmatpush1.msra.mxu0 0.0
    %306 = vmatprep.subr.mxu0 0.0
    %307 = vmatpush1.msra.mxu0 0.0
    %308 = vmatprep.subr.mxu0 0.0
    %309 = vmatpush1.msra.mxu0 0.0
    %310 = vmatprep.subr.mxu0 0.0
    %311 = vmatpush1.msra.mxu0 0.0
    %312 = vmatprep.subr.mxu0 0.0
    %313 = vmatpush1.msra.mxu0 0.0
    %314 = vmatprep.subr.mxu0 0.0
    %315 = vmatpush1.msra.mxu0 0.0
    %316 = vmatprep.subr.mxu0 0.0
    %317 = vmatpush1.msra.mxu0 0.0
    %318 = vmatprep.subr.mxu0 0.0
    %319 = vmatpush1.msra.mxu0 0.0
    %320 = vmatprep.subr.mxu0 0.0
    %321 = vmatpush1.msra.mxu0 0.0
    %322 = vmatprep.subr.mxu0 0.0
    %323 = vmatpush1.msra.mxu0 0.0
    %324 = vmatprep.subr.mxu0 0.0
    %325 = vmatpush1.msra.mxu0 0.0
    %326 = vmatprep.subr.mxu0 0.0
    %327 = vmatpush1.msra.mxu0 0.0
    %328 = vmatprep.subr.mxu0 0.0
    %329 = vmatpush1.msra.mxu0 0.0
    %330 = vmatprep.subr.mxu0 0.0
    %331 = vmatpush1.msra.mxu0 0.0
    %332 = vmatprep.subr.mxu0 0.0
    %333 = vmatpush1.msra.mxu0 0.0
    %334 = vmatprep.subr.mxu0 0.0
    %335 = vmatpush1.msra.mxu0 0.0
    %336 = vmatprep.subr.mxu0 0.0
    %337 = vmatpush1.msra.mxu0 0.0
    %338 = vmatprep.subr.mxu0 0.0
    %339 = vmatpush1.msra.mxu0 0.0
    %340 = vmatprep.subr.mxu0 0.0
    %341 = vmatpush1.msra.mxu0 0.0
    %342 = vmatprep.subr.mxu0 0.0
    %343 = vmatpush1.msra.mxu0 0.0
    %344 = vmatprep.subr.mxu0 0.0
    %345 = vmatpush1.msra.mxu0 0.0
    %346 = vmatprep.subr.mxu0 0.0
    %347 = vmatpush1.msra.mxu0 0.0
    %348 = vmatprep.subr.mxu0 0.0
    %349 = vmatpush1.msra.mxu0 0.0
    %350 = vmatprep.subr.mxu0 0.0
    %351 = vmatpush1.msra.mxu0 0.0
    %352 = vmatprep.subr.mxu0 0.0
    %353 = vmatpush1.msra.mxu0 0.0
    %354 = vmatprep.subr.mxu0 0.0
    %355 = vmatpush1.msra.mxu0 0.0
    %356 = vmatprep.subr.mxu0 0.0
    %357 = vmatpush1.msra.mxu0 0.0
    %358 = vmatprep.subr.mxu0 0.0
    %359 = vmatpush1.msra.mxu0 0.0
    %360 = vmatprep.subr.mxu0 0.0
    %361 = vmatpush1.msra.mxu0 0.0
    %362 = vmatprep.subr.mxu0 0.0
    %363 = vmatpush1.msra.mxu0 0.0
    %364 = vmatprep.subr.mxu0 0.0
    %365 = vmatpush1.msra.mxu0 0.0
    %366 = vmatprep.mubr.f32.mxu0 0.0
    %367 = vmatmul.mubr.f32.gmra.mrb[0].mxu0 %v300
    %v368 = vpop.f32.mrb[0].mxu0
    %v369 = vadd.f32 %v297, %v368
    %v370 = vpop.f32.mrb[0].mxu0
    %371 = vdwg.mxu0
    %v372 = vxor.u32 %v369, 2147483648
    %v373 = vmul.f32 %v372, 1.442695
    %v374 = vpow.pop %v373
    %v375 = vadd.f32 %v374, 1.0
    %v376 = vrcp.pop %v375
    %v377 = vmul.f32 1.0, %v376
    %378 = vst [vmem:[#allocation6] sm:$0x1] %v377
    // Predicated region
    $region34: #{tpu_custom_call.1} parent=1 // pred_check
      _
    $region35: #{tpu_custom_call.1} parent=1 // pred_check_branch
      %380 = sbr.rel (0) target = $region37
    $region36: #{tpu_custom_call.1} parent=1 // pred_region
      %s382 = ssub.s32 16, 16
      %383 = vsyncadd [#allocation5], %s382
      %s385 = sshll.u32 [#allocation6], 4
      %s386 = int_to_ptr.vmem [resolvable:$true] %s385
      %388 = dma.vmem_to_hbm [thread:$0]  %s386, 16, %s7, [#allocation5]
    $region37: #{tpu_custom_call.1} parent=1 // pred_fallthru
      _
    // Predicated region
    $region38: #{tpu_custom_call.1} parent=1 // pred_check
      _
    $region39: #{tpu_custom_call.1} parent=1 // pred_check_branch
      %390 = sbr.rel (0) target = $region41
    $region40: #{tpu_custom_call.1} parent=1 // pred_region
      %391 = dma.done [#allocation5], 16
    $region41: #{tpu_custom_call.1} parent=1 // pred_fallthru
      _
    %392 = vsyncpa [#allocation4], 1
    %393 = vsyncpa [#allocation5], 1

</llo_original>
